<compile_context>
chip_gen: v7x
topology: tpu7x:2x2x1
jax: 0.10.0
libtpu: 0.0.40
codegen_flags: <defaults>
</compile_context>

<pallas_src>
import functools

import jax
import jax.numpy as jnp
from jax.experimental import pallas as pl
from jax.experimental.pallas import tpu as pltpu


def _round_up(n: int, m: int) -> int:
    return ((n + m - 1) // m) * m


def actor_kernel(x_ref, w1t_ref, b1_ref, w2t_hbm, b2_ref, w3t_ref, b3_ref,
                 out_ref, w2t_vmem, dma_sem):
    # Kick off the big fc2-weight DMA immediately; it overlaps with the fc1 matmul.
    w2t_copy = pltpu.make_async_copy(w2t_hbm, w2t_vmem, dma_sem)
    w2t_copy.start()

    # fc1: bf16 operands -> f32 accumulate on the MXU; bias+ReLU in f32 on the VPU.
    x = x_ref[...].astype(jnp.bfloat16)                                   # [B, S]
    h1 = jnp.dot(x, w1t_ref[...], preferred_element_type=jnp.float32)     # [B, F1p]
    h1 = jnp.maximum(h1 + b1_ref[...], 0.0)

    # Only now do we need w2t in VMEM.
    w2t_copy.wait()
    h2 = jnp.dot(h1.astype(jnp.bfloat16), w2t_vmem[...],
                 preferred_element_type=jnp.float32)                      # [B, F2p]
    h2 = jnp.maximum(h2 + b2_ref[...], 0.0)

    # fc3 + tanh (tanh on the EUP, f32).
    h3 = jnp.dot(h2.astype(jnp.bfloat16), w3t_ref[...],
                 preferred_element_type=jnp.float32)                      # [B, A]
    out_ref[...] = jnp.tanh(h3 + b3_ref[...]).astype(out_ref.dtype)


def actor_forward(state, params):
    """state: [B, state_size] f32; params: dict of padded, pre-transposed bf16 weights + f32 biases."""
    w1t, b1, w2t, b2, w3t, b3 = (params["w1t"], params["b1"], params["w2t"],
                                 params["b2"], params["w3t"], params["b3"])
    B, S = state.shape
    F1 = w1t.shape[1]
    F2 = w2t.shape[1]
    A = w3t.shape[1]

    # Pad batch to a sublane multiple (8) so the whole-array block is layout-friendly.
    Bp = _round_up(B, 8)
    if Bp != B:
        state = jnp.pad(state, ((0, Bp - B), (0, 0)))

    flops = 2 * (Bp * S * F1 + Bp * F1 * F2 + Bp * F2 * A)
    bytes_accessed = (state.size * 4 + w1t.size * 2 + w2t.size * 2 + w3t.size * 2
                      + b1.size * 4 + b2.size * 4 + b3.size * 4 + Bp * A * 4)

    out = pl.pallas_call(
        actor_kernel,
        out_shape=jax.ShapeDtypeStruct((Bp, A), jnp.float32),
        in_specs=[
            pl.BlockSpec(memory_space=pltpu.VMEM),   # state
            pl.BlockSpec(memory_space=pltpu.VMEM),   # w1t
            pl.BlockSpec(memory_space=pltpu.VMEM),   # b1
            pl.BlockSpec(memory_space=pl.ANY),       # w2t: stays in HBM, DMA'd manually
            pl.BlockSpec(memory_space=pltpu.VMEM),   # b2
            pl.BlockSpec(memory_space=pltpu.VMEM),   # w3t
            pl.BlockSpec(memory_space=pltpu.VMEM),   # b3
        ],
        out_specs=pl.BlockSpec(memory_space=pltpu.VMEM),
        scratch_shapes=[
            pltpu.VMEM(w2t.shape, w2t.dtype),        # VMEM landing buffer for w2t
            pltpu.SemaphoreType.DMA,                 # completion semaphore
        ],
        cost_estimate=pl.CostEstimate(
            flops=flops, transcendentals=Bp * A, bytes_accessed=bytes_accessed),
    )(state, w1t, b1, w2t, b2, w3t, b3)
    return out[:B]


# jit so repeated calls keep the weights device-resident (amortizes the weight load).
actor_forward_jit = jax.jit(actor_forward)


def init_actor_params(key, state_size, action_size, fc1_units=600, fc2_units=400):
    """Synthetic init mimicking nn.Linear-style ranges. Returns (kernel_params, f32_params)."""
    ks = jax.random.split(key, 6)

    def uniform(k, shape, lim):
        return jax.random.uniform(k, shape, jnp.float32, minval=-lim, maxval=lim)

    lim1 = 1.0 / (state_size ** 0.5)
    w1 = uniform(ks[0], (fc1_units, state_size), lim1)
    b1 = uniform(ks[1], (fc1_units,), lim1)
    lim2 = 1.0 / (fc1_units ** 0.5)
    w2 = uniform(ks[2], (fc2_units, fc1_units), lim2)
    b2 = uniform(ks[3], (fc2_units,), lim2)
    lim3 = 3e-3                                      # reset_parameters range for fc3
    w3 = uniform(ks[4], (action_size, fc2_units), lim3)
    b3 = uniform(ks[5], (action_size,), lim3)

    f32_params = {"w1": w1, "b1": b1, "w2": w2, "b2": b2, "w3": w3, "b3": b3}

    # Zero-pad hidden dims to lane multiples: 600 -> 640, 400 -> 512. Zero padding leaves the
    # forward math unchanged (zero columns feed ReLU(0)=0; padded rows of w2t/w3t are zero).
    f1p = _round_up(fc1_units, 128)
    f2p = _round_up(fc2_units, 128)

    w1t = jnp.zeros((state_size, f1p), jnp.bfloat16).at[:, :fc1_units].set(
        w1.T.astype(jnp.bfloat16))
    b1p = jnp.zeros((1, f1p), jnp.float32).at[:, :fc1_units].set(b1[None, :])
    w2t = jnp.zeros((f1p, f2p), jnp.bfloat16).at[:fc1_units, :fc2_units].set(
        w2.T.astype(jnp.bfloat16))
    b2p = jnp.zeros((1, f2p), jnp.float32).at[:, :fc2_units].set(b2[None, :])
    w3t = jnp.zeros((f2p, action_size), jnp.bfloat16).at[:fc2_units, :].set(
        w3.T.astype(jnp.bfloat16))
    b3p = b3[None, :].astype(jnp.float32)

    kernel_params = {"w1t": w1t, "b1": b1p, "w2t": w2t, "b2": b2p, "w3t": w3t, "b3": b3p}
    return kernel_params, f32_params


def actor_reference_bf16(state, kp):
    """Pure-JAX reference with identical bf16/f32 mixed precision (tight check)."""
    h1 = jnp.dot(state.astype(jnp.bfloat16), kp["w1t"],
                 preferred_element_type=jnp.float32) + kp["b1"]
    h1 = jnp.maximum(h1, 0.0)
    h2 = jnp.dot(h1.astype(jnp.bfloat16), kp["w2t"],
                 preferred_element_type=jnp.float32) + kp["b2"]
    h2 = jnp.maximum(h2, 0.0)
    h3 = jnp.dot(h2.astype(jnp.bfloat16), kp["w3t"],
                 preferred_element_type=jnp.float32) + kp["b3"]
    return jnp.tanh(h3)


def actor_reference_f32(state, p):
    """Full-precision reference of the PyTorch forward pass (loose check)."""
    x = jnp.maximum(state @ p["w1"].T + p["b1"], 0.0)
    x = jnp.maximum(x @ p["w2"].T + p["b2"], 0.0)
    return jnp.tanh(x @ p["w3"].T + p["b3"])


if __name__ == "__main__":
    key = jax.random.PRNGKey(0)
    k_param, k_state = jax.random.split(key)

    batch, state_size, action_size = 8, 32, 4
    kernel_params, f32_params = init_actor_params(k_param, state_size, action_size,
                                                  fc1_units=600, fc2_units=400)
    state = jax.random.normal(k_state, (batch, state_size), jnp.float32)

    out = jax.block_until_ready(actor_forward_jit(state, kernel_params))

    ref_bf16 = actor_reference_bf16(state, kernel_params)
    ref_f32 = actor_reference_f32(state, f32_params)

    assert out.shape == (batch, action_size)
    assert jnp.allclose(out, ref_bf16, atol=2e-3, rtol=2e-2), "mismatch vs bf16 reference"
    assert jnp.allclose(out, ref_f32, atol=5e-2, rtol=5e-2), "mismatch vs f32 reference"
    print("KERNEL_OK")
</pallas_src>

<mosaic_0001>
module attributes {stable_mosaic.version = 11 : i64} {
  func.func @actor_kernel(%arg0: memref<8x32xf32, #tpu.memory_space<vmem>>, %arg1: memref<32x640xbf16, #tpu.memory_space<vmem>>, %arg2: memref<1x640xf32, #tpu.memory_space<vmem>>, %arg3: memref<640x512xbf16, #tpu.memory_space<any>>, %arg4: memref<1x512xf32, #tpu.memory_space<vmem>>, %arg5: memref<512x4xbf16, #tpu.memory_space<vmem>>, %arg6: memref<1x4xf32, #tpu.memory_space<vmem>>, %arg7: memref<8x4xf32, #tpu.memory_space<vmem>>, %arg8: memref<640x512xbf16, #tpu.memory_space<vmem>>, %arg9: memref<!tpu.dma_semaphore, #tpu.memory_space<semaphore_mem>>) attributes {dimension_semantics = [], scalar_prefetch = 0 : i64, scratch_operands = 2 : i64, tpu.core_type = #tpu.core_type<tc>} {
    tpu.enqueue_dma source(%arg3 : memref<640x512xbf16, #tpu.memory_space<any>>) target(%arg8 : memref<640x512xbf16, #tpu.memory_space<vmem>>) target_semaphore(%arg9 : memref<!tpu.dma_semaphore, #tpu.memory_space<semaphore_mem>>)
    %c0 = arith.constant 0 : index
    %c0_0 = arith.constant 0 : index
    %0 = vector.load %arg0[%c0, %c0_0] : memref<8x32xf32, #tpu.memory_space<vmem>>, vector<8x32xf32>
    %1 = arith.truncf %0 : vector<8x32xf32> to vector<8x32xbf16>
    %c0_1 = arith.constant 0 : index
    %c0_2 = arith.constant 0 : index
    %2 = vector.load %arg1[%c0_1, %c0_2] : memref<32x640xbf16, #tpu.memory_space<vmem>>, vector<32x640xbf16>
    %cst = arith.constant dense<0.000000e+00> : vector<8x640xf32>
    %3 = tpu.matmul %1, %2, %cst {dimension_numbers = #tpu.dot_dimension_numbers<[1], [0], [0], [1], [0, 0, 1, 1], [], []>} : vector<8x32xbf16>, vector<32x640xbf16>, vector<8x640xf32> -> vector<8x640xf32>
    %c0_3 = arith.constant 0 : index
    %c0_4 = arith.constant 0 : index
    %4 = vector.load %arg2[%c0_3, %c0_4] : memref<1x640xf32, #tpu.memory_space<vmem>>, vector<1x640xf32>
    %5 = vector.broadcast %4 : vector<1x640xf32> to vector<8x640xf32>
    %6 = arith.addf %3, %5 : vector<8x640xf32>
    %cst_5 = arith.constant 0.000000e+00 : f32
    %7 = vector.broadcast %cst_5 : f32 to vector<8x640xf32>
    %8 = arith.maximumf %6, %7 : vector<8x640xf32>
    tpu.wait_dma2 semaphore(%arg9 : memref<!tpu.dma_semaphore, #tpu.memory_space<semaphore_mem>>) src(%arg3 : memref<640x512xbf16, #tpu.memory_space<any>>) dst(%arg8 : memref<640x512xbf16, #tpu.memory_space<vmem>>)
    %9 = arith.truncf %8 : vector<8x640xf32> to vector<8x640xbf16>
    %c0_6 = arith.constant 0 : index
    %c0_7 = arith.constant 0 : index
    %10 = vector.load %arg8[%c0_6, %c0_7] : memref<640x512xbf16, #tpu.memory_space<vmem>>, vector<640x512xbf16>
    %cst_8 = arith.constant dense<0.000000e+00> : vector<8x512xf32>
    %11 = tpu.matmul %9, %10, %cst_8 {dimension_numbers = #tpu.dot_dimension_numbers<[1], [0], [0], [1], [0, 0, 1, 1], [], []>} : vector<8x640xbf16>, vector<640x512xbf16>, vector<8x512xf32> -> vector<8x512xf32>
    %c0_9 = arith.constant 0 : index
    %c0_10 = arith.constant 0 : index
    %12 = vector.load %arg4[%c0_9, %c0_10] : memref<1x512xf32, #tpu.memory_space<vmem>>, vector<1x512xf32>
    %13 = vector.broadcast %12 : vector<1x512xf32> to vector<8x512xf32>
    %14 = arith.addf %11, %13 : vector<8x512xf32>
    %cst_11 = arith.constant 0.000000e+00 : f32
    %15 = vector.broadcast %cst_11 : f32 to vector<8x512xf32>
    %16 = arith.maximumf %14, %15 : vector<8x512xf32>
    %17 = arith.truncf %16 : vector<8x512xf32> to vector<8x512xbf16>
    %c0_12 = arith.constant 0 : index
    %c0_13 = arith.constant 0 : index
    %18 = vector.load %arg5[%c0_12, %c0_13] : memref<512x4xbf16, #tpu.memory_space<vmem>>, vector<512x4xbf16>
    %cst_14 = arith.constant dense<0.000000e+00> : vector<8x4xf32>
    %19 = tpu.matmul %17, %18, %cst_14 {dimension_numbers = #tpu.dot_dimension_numbers<[1], [0], [0], [1], [0, 0, 1, 1], [], []>} : vector<8x512xbf16>, vector<512x4xbf16>, vector<8x4xf32> -> vector<8x4xf32>
    %c0_15 = arith.constant 0 : index
    %c0_16 = arith.constant 0 : index
    %20 = vector.load %arg6[%c0_15, %c0_16] : memref<1x4xf32, #tpu.memory_space<vmem>>, vector<1x4xf32>
    %21 = vector.broadcast %20 : vector<1x4xf32> to vector<8x4xf32>
    %22 = arith.addf %19, %21 : vector<8x4xf32>
    %23 = math.tanh %22 : vector<8x4xf32>
    %c0_17 = arith.constant 0 : index
    %c0_18 = arith.constant 0 : index
    %24 = vector.load %arg7[%c0_17, %c0_18] : memref<8x4xf32, #tpu.memory_space<vmem>>, vector<8x4xf32>
    tpu.vector_store %arg7[%c0_17, %c0_18], %23 {strides = array<i32>} : memref<8x4xf32, #tpu.memory_space<vmem>>, vector<8x4xf32>,
    return
  }
}

</mosaic_0001>

<llo_original>
// kernel: actor_forward.1
$region0: #{actor_forward.1}
  #allocation0 [shape = 'u32[]', space=smem, size = 0x4, offset = 0x4, fixed_abs, tag = 'smem constant byte address 0x4 - core index']
  #allocation1 [shape = 'u32[144,128]{1,0:T(1,128)}', space=vmem, size = 0x12000, scoped, tag = 'internal scratch']
  #allocation2 [shape = 'bf16[640,512]{1,0:T(16,128)(2,1)}', space=vmem, size = 0xa0000, scoped, tag = 'scratch operand']
  #allocation3 [shape = 's32[1]{0}', space=sflag, size = 0x4, scoped, tag = 'scratch operand']
  #allocation4 [shape = 's32[]', space=sflag, size = 0x4, offset = 0, fixed_abs, tag = 'sflag constant byte address 0x0 - dummy sync flag']
  %s0 = inlined_call_operand.vmem [shape: f32[8,32], index: 0, kind: input, shape index: {}]
  %s1 = inlined_call_operand.vmem [shape: bf16[32,640], index: 1, kind: input, shape index: {}]
  %s2 = inlined_call_operand.vmem [shape: f32[1,640], index: 2, kind: input, shape index: {}]
  %s3 = inlined_call_operand.hbm [shape: bf16[640,512], index: 3, kind: input, shape index: {}]
  %s4 = inlined_call_operand.vmem [shape: f32[1,512], index: 4, kind: input, shape index: {}]
  %s5 = inlined_call_operand.vmem [shape: bf16[512,4], index: 5, kind: input, shape index: {}]
  %s6 = inlined_call_operand.vmem [shape: f32[1,4], index: 6, kind: input, shape index: {}]
  %s7 = inlined_call_operand.vmem [shape: f32[8,4], index: 7, kind: output, shape index: {}]
  %s8 = sld [smem:[#allocation0]]
  $region34: #{actor_forward.1} parent=0
    _
  %s10 = ssub.s32 1, %s8
  %s11 = scalar_select 0, %s10, %s8
  $region1: #{actor_forward.1} parent=0
    #allocation5 [shape = 'u32[9]{0}', space=smem, size = 0x24, scoped, tag = 'DMA stride descriptor']
    // Predicated region
    $region2: #{actor_forward.1} parent=1 // pred_check
      _
    $region3: #{actor_forward.1} parent=1 // pred_check_branch
      %13 = sbr.rel (0) target = $region5
    $region4: #{actor_forward.1} parent=1 // pred_region
      _
    $region5: #{actor_forward.1} parent=1 // pred_fallthru
      _
    // Predicated region
    $region6: #{actor_forward.1} parent=1 // pred_check
      _
    $region7: #{actor_forward.1} parent=1 // pred_check_branch
      %15 = sbr.rel (0) target = $region9
    $region8: #{actor_forward.1} parent=1 // pred_region
      _
    $region9: #{actor_forward.1} parent=1 // pred_fallthru
      _
    // Predicated region
    $region10: #{actor_forward.1} parent=1 // pred_check
      _
    $region11: #{actor_forward.1} parent=1 // pred_check_branch
      %17 = sbr.rel (0) target = $region13
    $region12: #{actor_forward.1} parent=1 // pred_region
      _
    $region13: #{actor_forward.1} parent=1 // pred_fallthru
      _
    // Predicated region
    $region14: #{actor_forward.1} parent=1 // pred_check
      _
    $region15: #{actor_forward.1} parent=1 // pred_check_branch
      %19 = sbr.rel (0) target = $region17
    $region16: #{actor_forward.1} parent=1 // pred_region
      _
    $region17: #{actor_forward.1} parent=1 // pred_fallthru
      _
    // Predicated region
    $region18: #{actor_forward.1} parent=1 // pred_check
      _
    $region19: #{actor_forward.1} parent=1 // pred_check_branch
      %21 = sbr.rel (0) target = $region21
    $region20: #{actor_forward.1} parent=1 // pred_region
      _
    $region21: #{actor_forward.1} parent=1 // pred_fallthru
      _
    // Predicated region
    $region22: #{actor_forward.1} parent=1 // pred_check
      _
    $region23: #{actor_forward.1} parent=1 // pred_check_branch
      %23 = sbr.rel (0) target = $region25
    $region24: #{actor_forward.1} parent=1 // pred_region
      _
    $region25: #{actor_forward.1} parent=1 // pred_fallthru
      _
    %s26 = sshll.u32 1, 14
    %s27 = sxor.u32 4294967295, %s26
    %s29 = sld [smem:[#allocation0]]
    %s30 = sadd.s32 2, %s29
    %s32 = sshll.u32 7, 26
    %s33 = sxor.u32 4294967295, %s32
    %s34 = sand.u32 0, %s33
    %s35 = sshll.u32 %s30, 26
    %s36 = sor.u32 %s34, %s35
    %s37 = sshll.u32 [#allocation2], 4
    %s38 = int_to_ptr.vmem [resolvable:$true] %s37
    %41 = sst [smem:[#allocation5]] 512
    %s42 = scalar_lea.smem [#allocation5], 1
    %43 = sst [smem:[%s42]] 512
    %s44 = scalar_lea.smem [#allocation5], 2
    %45 = sst [smem:[%s44]] 4
    %s46 = scalar_lea.smem [#allocation5], 3
    %47 = sst [smem:[%s46]] 64
    %s48 = scalar_lea.smem [#allocation5], 4
    %49 = sst [smem:[%s48]] 128
    %s50 = scalar_lea.smem [#allocation5], 5
    %51 = sst [smem:[%s50]] 2
    %s52 = scalar_lea.smem [#allocation5], 6
    %53 = sst [smem:[%s52]] 256
    %s54 = scalar_lea.smem [#allocation5], 7
    %55 = sst [smem:[%s54]] 64
    %s56 = scalar_lea.smem [#allocation5], 8
    %57 = sst [smem:[%s56]] 4
    %59 = dma.general %s3, 20480, %s38, [#allocation3], [#allocation4], [#allocation5], %s36, 0
    %v60 = vld [vmem:[%s0] sm:$0xff]
    %v61 = vpack.c.bf16 %v60, %v60
    %v62 = vld [vmem:[%s1] sm:$0xff]
    %v63 = vld [vmem:[%s1 + $0x8] sm:$0xff]
    %v64 = vld [vmem:[%s1 + $0x10] sm:$0xf]
    %v65 = vld [vmem:[%s1 + $0x14] sm:$0xff]
    %v66 = vld [vmem:[%s1 + $0x1c] sm:$0xff]
    %v67 = vld [vmem:[%s1 + $0x24] sm:$0xf]
    %v68 = vld [vmem:[%s1 + $0x28] sm:$0xff]
    %v69 = vld [vmem:[%s1 + $0x30] sm:$0xff]
    %v70 = vld [vmem:[%s1 + $0x38] sm:$0xf]
    %v71 = vld [vmem:[%s1 + $0x3c] sm:$0xff]
    %v72 = vld [vmem:[%s1 + $0x44] sm:$0xff]
    %v73 = vld [vmem:[%s1 + $0x4c] sm:$0xf]
    %v74 = vld [vmem:[%s2] sm:$0x1f]
    %v76 = vlaneseq
    %v77 = vshrl.u32 %v76, 7
    %v78 = vsub.s32 0, %v77
    %v79 = vrot.slane %v74, %v78
    %v80 = vlaneseq
    %v81 = vshrl.u32 %v80, 7
    %v82 = vsub.s32 1, %v81
    %v83 = vrot.slane %v74, %v82
    %v84 = vlaneseq
    %v85 = vshrl.u32 %v84, 7
    %v86 = vsub.s32 2, %v85
    %v87 = vrot.slane %v74, %v86
    %v88 = vlaneseq
    %v89 = vshrl.u32 %v88, 7
    %v90 = vsub.s32 3, %v89
    %v91 = vrot.slane %v74, %v90
    %v92 = vlaneseq
    %v93 = vshrl.u32 %v92, 7
    %v94 = vsub.s32 4, %v93
    %v95 = vrot.slane %v74, %v94
    %v113 = vunpack.c.l.b16 %v62
    %v114 = vunpack.c.h.b16 %v62
    %v115 = vunpack.c.l.b16 %v63
    %v116 = vunpack.c.h.b16 %v63
    %v117 = vunpack.c.l.b16 %v64
    %v118 = vunpack.c.l.b16 %v65
    %v119 = vunpack.c.h.b16 %v65
    %v120 = vunpack.c.l.b16 %v66
    %v121 = vunpack.c.h.b16 %v66
    %v122 = vunpack.c.l.b16 %v67
    %v123 = vunpack.c.l.b16 %v68
    %v124 = vunpack.c.h.b16 %v68
    %v125 = vunpack.c.l.b16 %v69
    %v126 = vunpack.c.h.b16 %v69
    %v127 = vunpack.c.l.b16 %v70
    %v128 = vunpack.c.l.b16 %v71
    %v129 = vunpack.c.h.b16 %v71
    %v130 = vunpack.c.l.b16 %v72
    %v131 = vunpack.c.h.b16 %v72
    %v132 = vunpack.c.l.b16 %v73
    %v133 = vpack.c.b16 %v118, %v113
    %v134 = vpack.c.b16 %v119, %v114
    %v135 = vpack.c.b16 %v120, %v115
    %v136 = vpack.c.b16 %v121, %v116
    %v137 = vpack.c.b16 %v122, %v117
    %v138 = vpack.c.b16 %v128, %v123
    %v139 = vpack.c.b16 %v129, %v124
    %v140 = vpack.c.b16 %v130, %v125
    %v141 = vpack.c.b16 %v131, %v126
    %v142 = vpack.c.b16 %v132, %v127
    %vm153 = vcmask 261120
    %v155 = vsel %vm153, %v61, 0
    %157 = vmatprep.subr.bf16.mxu0 %v134
    %158 = vmatpush1.bf16.msra.mxu0 %v133
    %159 = vmatprep.subr.bf16.mxu0 %v139
    %160 = vmatpush1.bf16.msra.mxu0 %v138
    %161 = vmatprep.subr.bf16.mxu0 0
    %162 = vmatpush1.bf16.msra.mxu0 0
    %163 = vmatprep.subr.bf16.mxu0 0
    %164 = vmatpush1.bf16.msra.mxu0 0
    %165 = vmatprep.subr.bf16.mxu0 0
    %166 = vmatpush1.bf16.msra.mxu0 0
    %167 = vmatprep.subr.bf16.mxu0 0
    %168 = vmatpush1.bf16.msra.mxu0 0
    %169 = vmatprep.subr.bf16.mxu0 0
    %170 = vmatpush1.bf16.msra.mxu0 0
    %171 = vmatprep.subr.bf16.mxu0 0
    %172 = vmatpush1.bf16.msra.mxu0 0
    %173 = vmatprep.subr.bf16.mxu0 0
    %174 = vmatpush1.bf16.msra.mxu0 0
    %175 = vmatprep.subr.bf16.mxu0 0
    %176 = vmatpush1.bf16.msra.mxu0 0
    %177 = vmatprep.subr.bf16.mxu0 0
    %178 = vmatpush1.bf16.msra.mxu0 0
    %179 = vmatprep.subr.bf16.mxu0 0
    %180 = vmatpush1.bf16.msra.mxu0 0
    %181 = vmatprep.subr.bf16.mxu0 0
    %182 = vmatpush1.bf16.msra.mxu0 0
    %183 = vmatprep.subr.bf16.mxu0 0
    %184 = vmatpush1.bf16.msra.mxu0 0
    %185 = vmatprep.subr.bf16.mxu0 0
    %186 = vmatpush1.bf16.msra.mxu0 0
    %187 = vmatprep.subr.bf16.mxu0 0
    %188 = vmatpush1.bf16.msra.mxu0 0
    %189 = vmatprep.mubr.bf16.mxu0 0
    %190 = vmatmul.mubr.bf16.gmra.mrb[0].mxu0 %v155
    %v191 = vpop.f32.mrb[0].mxu0
    %v192 = vadd.f32 %v79, %v191
    %v193 = vpop.f32.mrb[0].mxu0
    %v194 = vadd.f32 %v83, %v193
    %v195 = vpop.f32.mrb[0].mxu0
    %v196 = vpop.f32.mrb[0].mxu0
    %197 = vdwg.mxu0
    %198 = vmatprep.subr.bf16.mxu0 %v136
    %199 = vmatpush1.bf16.msra.mxu0 %v135
    %200 = vmatprep.subr.bf16.mxu0 %v141
    %201 = vmatpush1.bf16.msra.mxu0 %v140
    %202 = vmatprep.subr.bf16.mxu0 0
    %203 = vmatpush1.bf16.msra.mxu0 0
    %204 = vmatprep.subr.bf16.mxu0 0
    %205 = vmatpush1.bf16.msra.mxu0 0
    %206 = vmatprep.subr.bf16.mxu0 0
    %207 = vmatpush1.bf16.msra.mxu0 0
    %208 = vmatprep.subr.bf16.mxu0 0
    %209 = vmatpush1.bf16.msra.mxu0 0
    %210 = vmatprep.subr.bf16.mxu0 0
    %211 = vmatpush1.bf16.msra.mxu0 0
    %212 = vmatprep.subr.bf16.mxu0 0
    %213 = vmatpush1.bf16.msra.mxu0 0
    %214 = vmatprep.subr.bf16.mxu0 0
    %215 = vmatpush1.bf16.msra.mxu0 0
    %216 = vmatprep.subr.bf16.mxu0 0
    %217 = vmatpush1.bf16.msra.mxu0 0
    %218 = vmatprep.subr.bf16.mxu0 0
    %219 = vmatpush1.bf16.msra.mxu0 0
    %220 = vmatprep.subr.bf16.mxu0 0
    %221 = vmatpush1.bf16.msra.mxu0 0
    %222 = vmatprep.subr.bf16.mxu0 0
    %223 = vmatpush1.bf16.msra.mxu0 0
    %224 = vmatprep.subr.bf16.mxu0 0
    %225 = vmatpush1.bf16.msra.mxu0 0
    %226 = vmatprep.subr.bf16.mxu0 0
    %227 = vmatpush1.bf16.msra.mxu0 0
    %228 = vmatprep.subr.bf16.mxu0 0
    %229 = vmatpush1.bf16.msra.mxu0 0
    %230 = vmatprep.mubr.bf16.mxu0 0
    %231 = vmatmul.mubr.bf16.gmra.mrb[0].mxu0 %v155
    %v232 = vpop.f32.mrb[0].mxu0
    %v233 = vadd.f32 %v87, %v232
    %v234 = vpop.f32.mrb[0].mxu0
    %v235 = vadd.f32 %v91, %v234
    %v236 = vpop.f32.mrb[0].mxu0
    %v237 = vpop.f32.mrb[0].mxu0
    %238 = vdwg.mxu0
    %239 = vmatprep.subr.bf16.mxu0 0
    %240 = vmatpush1.bf16.msra.mxu0 %v137
    %241 = vmatprep.subr.bf16.mxu0 0
    %242 = vmatpush1.bf16.msra.mxu0 %v142
    %243 = vmatprep.subr.bf16.mxu0 0
    %244 = vmatpush1.bf16.msra.mxu0 0
    %245 = vmatprep.subr.bf16.mxu0 0
    %246 = vmatpush1.bf16.msra.mxu0 0
    %247 = vmatprep.subr.bf16.mxu0 0
    %248 = vmatpush1.bf16.msra.mxu0 0
    %249 = vmatprep.subr.bf16.mxu0 0
    %250 = vmatpush1.bf16.msra.mxu0 0
    %251 = vmatprep.subr.bf16.mxu0 0
    %252 = vmatpush1.bf16.msra.mxu0 0
    %253 = vmatprep.subr.bf16.mxu0 0
    %254 = vmatpush1.bf16.msra.mxu0 0
    %255 = vmatprep.subr.bf16.mxu0 0
    %256 = vmatpush1.bf16.msra.mxu0 0
    %257 = vmatprep.subr.bf16.mxu0 0
    %258 = vmatpush1.bf16.msra.mxu0 0
    %259 = vmatprep.subr.bf16.mxu0 0
    %260 = vmatpush1.bf16.msra.mxu0 0
    %261 = vmatprep.subr.bf16.mxu0 0
    %262 = vmatpush1.bf16.msra.mxu0 0
    %263 = vmatprep.subr.bf16.mxu0 0
    %264 = vmatpush1.bf16.msra.mxu0 0
    %265 = vmatprep.subr.bf16.mxu0 0
    %266 = vmatpush1.bf16.msra.mxu0 0
    %267 = vmatprep.subr.bf16.mxu0 0
    %268 = vmatpush1.bf16.msra.mxu0 0
    %269 = vmatprep.subr.bf16.mxu0 0
    %270 = vmatpush1.bf16.msra.mxu0 0
    %271 = vmatprep.mubr.bf16.mxu0 0
    %272 = vmatmul.mubr.bf16.gmra.mrb[0].mxu0 %v155
    %v273 = vpop.f32.mrb[0].mxu0
    %v274 = vadd.f32 %v95, %v273
    %v275 = vpop.f32.mrb[0].mxu0
    %v276 = vpop.f32.mrb[0].mxu0
    %v277 = vpop.f32.mrb[0].mxu0
    %278 = vdwg.mxu0
    %v279 = vmax.f32 %v192, 0.0
    %v280 = vmax.f32 %v194, 0.0
    %v281 = vmax.f32 %v233, 0.0
    %v282 = vmax.f32 %v235, 0.0
    %v283 = vmax.f32 %v274, 0.0
    %s284 = smul.u32 4, 80
    %s285 = smul.u32 %s284, 4
    %s286 = sshll.u32 %s285, 4
    %287 = dma.done [#allocation3], %s286
    %v288 = vpack.c.bf16 %v279, %v279
    %v289 = vpack.c.bf16 %v280, %v280
    %v290 = vpack.c.bf16 %v281, %v281
    %v291 = vpack.c.bf16 %v282, %v282
    %v292 = vpack.c.bf16 %v283, %v283
    %v293 = vld [vmem:[#allocation2] sm:$0xff]
    %v294 = vld [vmem:[#allocation2 + $0x8] sm:$0xff]
    %v295 = vld [vmem:[#allocation2 + $0x10] sm:$0xff]
    %v296 = vld [vmem:[#allocation2 + $0x18] sm:$0xff]
    %v297 = vld [vmem:[#allocation2 + $0x20] sm:$0xff]
    %v298 = vld [vmem:[#allocation2 + $0x28] sm:$0xff]
    %v299 = vld [vmem:[#allocation2 + $0x30] sm:$0xff]
    %v300 = vld [vmem:[#allocation2 + $0x38] sm:$0xff]
    %v301 = vld [vmem:[#allocation2 + $0x40] sm:$0xff]
    %v302 = vld [vmem:[#allocation2 + $0x48] sm:$0xff]
    %v303 = vld [vmem:[#allocation2 + $0x50] sm:$0xff]
    %v304 = vld [vmem:[#allocation2 + $0x58] sm:$0xff]
    %v305 = vld [vmem:[#allocation2 + $0x60] sm:$0xff]
    %v306 = vld [vmem:[#allocation2 + $0x68] sm:$0xff]
    %v307 = vld [vmem:[#allocation2 + $0x70] sm:$0xff]
    %v308 = vld [vmem:[#allocation2 + $0x78] sm:$0xff]
    %v309 = vld [vmem:[#allocation2 + $0x80] sm:$0xff]
    %v310 = vld [vmem:[#allocation2 + $0x88] sm:$0xff]
    %v311 = vld [vmem:[#allocation2 + $0x90] sm:$0xff]
    %v312 = vld [vmem:[#allocation2 + $0x98] sm:$0xff]
    %v313 = vld [vmem:[#allocation2 + $0xa0] sm:$0xff]
    %v314 = vld [vmem:[#allocation2 + $0xa8] sm:$0xff]
    %v315 = vld [vmem:[#allocation2 + $0xb0] sm:$0xff]
    %v316 = vld [vmem:[#allocation2 + $0xb8] sm:$0xff]
    %v317 = vld [vmem:[#allocation2 + $0xc0] sm:$0xff]
    %v318 = vld [vmem:[#allocation2 + $0xc8] sm:$0xff]
    %v319 = vld [vmem:[#allocation2 + $0xd0] sm:$0xff]
    %v320 = vld [vmem:[#allocation2 + $0xd8] sm:$0xff]
    %v321 = vld [vmem:[#allocation2 + $0xe0] sm:$0xff]
    %v322 = vld [vmem:[#allocation2 + $0xe8] sm:$0xff]
    %v323 = vld [vmem:[#allocation2 + $0xf0] sm:$0xff]
    %v324 = vld [vmem:[#allocation2 + $0xf8] sm:$0xff]
    %v325 = vld [vmem:[#allocation2 + $0x100] sm:$0xff]
    %v326 = vld [vmem:[#allocation2 + $0x108] sm:$0xff]
    %v327 = vld [vmem:[#allocation2 + $0x110] sm:$0xff]
    %v328 = vld [vmem:[#allocation2 + $0x118] sm:$0xff]
    %v329 = vld [vmem:[#allocation2 + $0x120] sm:$0xff]
    %v330 = vld [vmem:[#allocation2 + $0x128] sm:$0xff]
    %v331 = vld [vmem:[#allocation2 + $0x130] sm:$0xff]
    %v332 = vld [vmem:[#allocation2 + $0x138] sm:$0xff]
    %v333 = vld [vmem:[#allocation2 + $0x140] sm:$0xff]
    %v334 = vld [vmem:[#allocation2 + $0x148] sm:$0xff]
    %v335 = vld [vmem:[#allocation2 + $0x150] sm:$0xff]
    %v336 = vld [vmem:[#allocation2 + $0x158] sm:$0xff]
    %v337 = vld [vmem:[#allocation2 + $0x160] sm:$0xff]
    %v338 = vld [vmem:[#allocation2 + $0x168] sm:$0xff]
    %v339 = vld [vmem:[#allocation2 + $0x170] sm:$0xff]
    %v340 = vld [vmem:[#allocation2 + $0x178] sm:$0xff]
    %v341 = vld [vmem:[#allocation2 + $0x180] sm:$0xff]
    %v342 = vld [vmem:[#allocation2 + $0x188] sm:$0xff]
    %v343 = vld [vmem:[#allocation2 + $0x190] sm:$0xff]
    %v344 = vld [vmem:[#allocation2 + $0x198] sm:$0xff]
    %v345 = vld [vmem:[#allocation2 + $0x1a0] sm:$0xff]
    %v346 = vld [vmem:[#allocation2 + $0x1a8] sm:$0xff]
    %v347 = vld [vmem:[#allocation2 + $0x1b0] sm:$0xff]
    %v348 = vld [vmem:[#allocation2 + $0x1b8] sm:$0xff]
    %v349 = vld [vmem:[#allocation2 + $0x1c0] sm:$0xff]
    %v350 = vld [vmem:[#allocation2 + $0x1c8] sm:$0xff]
    %v351 = vld [vmem:[#allocation2 + $0x1d0] sm:$0xff]
    %v352 = vld [vmem:[#allocation2 + $0x1d8] sm:$0xff]
    %v353 = vld [vmem:[#allocation2 + $0x1e0] sm:$0xff]
    %v354 = vld [vmem:[#allocation2 + $0x1e8] sm:$0xff]
    %v355 = vld [vmem:[#allocation2 + $0x1f0] sm:$0xff]
    %v356 = vld [vmem:[#allocation2 + $0x1f8] sm:$0xff]
    %v357 = vld [vmem:[#allocation2 + $0x200] sm:$0xff]
    %v358 = vld [vmem:[#allocation2 + $0x208] sm:$0xff]
    %v359 = vld [vmem:[#allocation2 + $0x210] sm:$0xff]
    %v360 = vld [vmem:[#allocation2 + $0x218] sm:$0xff]
    %v361 = vld [vmem:[#allocation2 + $0x220] sm:$0xff]
    %v362 = vld [vmem:[#allocation2 + $0x228] sm:$0xff]
    %v363 = vld [vmem:[#allocation2 + $0x230] sm:$0xff]
    %v364 = vld [vmem:[#allocation2 + $0x238] sm:$0xff]
    %v365 = vld [vmem:[#allocation2 + $0x240] sm:$0xff]
    %v366 = vld [vmem:[#allocation2 + $0x248] sm:$0xff]
    %v367 = vld [vmem:[#allocation2 + $0x250] sm:$0xff]
    %v368 = vld [vmem:[#allocation2 + $0x258] sm:$0xff]
    %v369 = vld [vmem:[#allocation2 + $0x260] sm:$0xff]
    %v370 = vld [vmem:[#allocation2 + $0x268] sm:$0xff]
    %v371 = vld [vmem:[#allocation2 + $0x270] sm:$0xff]
    %v372 = vld [vmem:[#allocation2 + $0x278] sm:$0xff]
    %v373 = vld [vmem:[#allocation2 + $0x280] sm:$0xff]
    %v374 = vld [vmem:[#allocation2 + $0x288] sm:$0xff]
    %v375 = vld [vmem:[#allocation2 + $0x290] sm:$0xff]
    %v376 = vld [vmem:[#allocation2 + $0x298] sm:$0xff]
    %v377 = vld [vmem:[#allocation2 + $0x2a0] sm:$0xff]
    %v378 = vld [vmem:[#allocation2 + $0x2a8] sm:$0xff]
    %v379 = vld [vmem:[#allocation2 + $0x2b0] sm:$0xff]
    %v380 = vld [vmem:[#allocation2 + $0x2b8] sm:$0xff]
    %v381 = vld [vmem:[#allocation2 + $0x2c0] sm:$0xff]
    %v382 = vld [vmem:[#allocation2 + $0x2c8] sm:$0xff]
    %v383 = vld [vmem:[#allocation2 + $0x2d0] sm:$0xff]
    %v384 = vld [vmem:[#allocation2 + $0x2d8] sm:$0xff]
    %v385 = vld [vmem:[#allocation2 + $0x2e0] sm:$0xff]
    %v386 = vld [vmem:[#allocation2 + $0x2e8] sm:$0xff]
    %v387 = vld [vmem:[#allocation2 + $0x2f0] sm:$0xff]
    %v388 = vld [vmem:[#allocation2 + $0x2f8] sm:$0xff]
    %v389 = vld [vmem:[#allocation2 + $0x300] sm:$0xff]
    %v390 = vld [vmem:[#allocation2 + $0x308] sm:$0xff]
    %v391 = vld [vmem:[#allocation2 + $0x310] sm:$0xff]
    %v392 = vld [vmem:[#allocation2 + $0x318] sm:$0xff]
    %v393 = vld [vmem:[#allocation2 + $0x320] sm:$0xff]
    %v394 = vld [vmem:[#allocation2 + $0x328] sm:$0xff]
    %v395 = vld [vmem:[#allocation2 + $0x330] sm:$0xff]
    %v396 = vld [vmem:[#allocation2 + $0x338] sm:$0xff]
    %v397 = vld [vmem:[#allocation2 + $0x340] sm:$0xff]
    %v398 = vld [vmem:[#allocation2 + $0x348] sm:$0xff]
    %v399 = vld [vmem:[#allocation2 + $0x350] sm:$0xff]
    %v400 = vld [vmem:[#allocation2 + $0x358] sm:$0xff]
    %v401 = vld [vmem:[#allocation2 + $0x360] sm:$0xff]
    %v402 = vld [vmem:[#allocation2 + $0x368] sm:$0xff]
    %v403 = vld [vmem:[#allocation2 + $0x370] sm:$0xff]
    %v404 = vld [vmem:[#allocation2 + $0x378] sm:$0xff]
    %v405 = vld [vmem:[#allocation2 + $0x380] sm:$0xff]
    %v406 = vld [vmem:[#allocation2 + $0x388] sm:$0xff]
    %v407 = vld [vmem:[#allocation2 + $0x390] sm:$0xff]
    %v408 = vld [vmem:[#allocation2 + $0x398] sm:$0xff]
    %v409 = vld [vmem:[#allocation2 + $0x3a0] sm:$0xff]
    %v410 = vld [vmem:[#allocation2 + $0x3a8] sm:$0xff]
    %v411 = vld [vmem:[#allocation2 + $0x3b0] sm:$0xff]
    %v412 = vld [vmem:[#allocation2 + $0x3b8] sm:$0xff]
    %v413 = vld [vmem:[#allocation2 + $0x3c0] sm:$0xff]
    %v414 = vld [vmem:[#allocation2 + $0x3c8] sm:$0xff]
    %v415 = vld [vmem:[#allocation2 + $0x3d0] sm:$0xff]
    %v416 = vld [vmem:[#allocation2 + $0x3d8] sm:$0xff]
    %v417 = vld [vmem:[#allocation2 + $0x3e0] sm:$0xff]
    %v418 = vld [vmem:[#allocation2 + $0x3e8] sm:$0xff]
    %v419 = vld [vmem:[#allocation2 + $0x3f0] sm:$0xff]
    %v420 = vld [vmem:[#allocation2 + $0x3f8] sm:$0xff]
    %v421 = vld [vmem:[#allocation2 + $0x400] sm:$0xff]
    %v422 = vld [vmem:[#allocation2 + $0x408] sm:$0xff]
    %v423 = vld [vmem:[#allocation2 + $0x410] sm:$0xff]
    %v424 = vld [vmem:[#allocation2 + $0x418] sm:$0xff]
    %v425 = vld [vmem:[#allocation2 + $0x420] sm:$0xff]
    %v426 = vld [vmem:[#allocation2 + $0x428] sm:$0xff]
    %v427 = vld [vmem:[#allocation2 + $0x430] sm:$0xff]
    %v428 = vld [vmem:[#allocation2 + $0x438] sm:$0xff]
    %v429 = vld [vmem:[#allocation2 + $0x440] sm:$0xff]
    %v430 = vld [vmem:[#allocation2 + $0x448] sm:$0xff]
    %v431 = vld [vmem:[#allocation2 + $0x450] sm:$0xff]
    %v432 = vld [vmem:[#allocation2 + $0x458] sm:$0xff]
    %v433 = vld [vmem:[#allocation2 + $0x460] sm:$0xff]
    %v434 = vld [vmem:[#allocation2 + $0x468] sm:$0xff]
    %v435 = vld [vmem:[#allocation2 + $0x470] sm:$0xff]
    %v436 = vld [vmem:[#allocation2 + $0x478] sm:$0xff]
    %v437 = vld [vmem:[#allocation2 + $0x480] sm:$0xff]
    %v438 = vld [vmem:[#allocation2 + $0x488] sm:$0xff]
    %v439 = vld [vmem:[#allocation2 + $0x490] sm:$0xff]
    %v440 = vld [vmem:[#allocation2 + $0x498] sm:$0xff]
    %v441 = vld [vmem:[#allocation2 + $0x4a0] sm:$0xff]
    %v442 = vld [vmem:[#allocation2 + $0x4a8] sm:$0xff]
    %v443 = vld [vmem:[#allocation2 + $0x4b0] sm:$0xff]
    %v444 = vld [vmem:[#allocation2 + $0x4b8] sm:$0xff]
    %v445 = vld [vmem:[#allocation2 + $0x4c0] sm:$0xff]
    %v446 = vld [vmem:[#allocation2 + $0x4c8] sm:$0xff]
    %v447 = vld [vmem:[#allocation2 + $0x4d0] sm:$0xff]
    %v448 = vld [vmem:[#allocation2 + $0x4d8] sm:$0xff]
    %v449 = vld [vmem:[#allocation2 + $0x4e0] sm:$0xff]
    %v450 = vld [vmem:[#allocation2 + $0x4e8] sm:$0xff]
    %v451 = vld [vmem:[#allocation2 + $0x4f0] sm:$0xff]
    %v452 = vld [vmem:[#allocation2 + $0x4f8] sm:$0xff]
    %v453 = vld [vmem:[%s4] sm:$0xf]
    %v455 = vlaneseq
    %v456 = vshrl.u32 %v455, 7
    %v457 = vsub.s32 0, %v456
    %v458 = vrot.slane %v453, %v457
    %v459 = vlaneseq
    %v460 = vshrl.u32 %v459, 7
    %v461 = vsub.s32 1, %v460
    %v462 = vrot.slane %v453, %v461
    %v463 = vlaneseq
    %v464 = vshrl.u32 %v463, 7
    %v465 = vsub.s32 2, %v464
    %v466 = vrot.slane %v453, %v465
    %v467 = vlaneseq
    %v468 = vshrl.u32 %v467, 7
    %v469 = vsub.s32 3, %v468
    %v470 = vrot.slane %v453, %v469
    %475 = vmatprep.subr.bf16.mxu0 %v294
    %476 = vmatpush1.bf16.msra.mxu0 %v293
    %477 = vmatprep.subr.bf16.mxu0 %v298
    %478 = vmatpush1.bf16.msra.mxu0 %v297
    %479 = vmatprep.subr.bf16.mxu0 %v302
    %480 = vmatpush1.bf16.msra.mxu0 %v301
    %481 = vmatprep.subr.bf16.mxu0 %v306
    %482 = vmatpush1.bf16.msra.mxu0 %v305
    %483 = vmatprep.subr.bf16.mxu0 %v310
    %484 = vmatpush1.bf16.msra.mxu0 %v309
    %485 = vmatprep.subr.bf16.mxu0 %v314
    %486 = vmatpush1.bf16.msra.mxu0 %v313
    %487 = vmatprep.subr.bf16.mxu0 %v318
    %488 = vmatpush1.bf16.msra.mxu0 %v317
    %489 = vmatprep.subr.bf16.mxu0 %v322
    %490 = vmatpush1.bf16.msra.mxu0 %v321
    %491 = vmatprep.subr.bf16.mxu0 %v326
    %492 = vmatpush1.bf16.msra.mxu0 %v325
    %493 = vmatprep.subr.bf16.mxu0 %v330
    %494 = vmatpush1.bf16.msra.mxu0 %v329
    %495 = vmatprep.subr.bf16.mxu0 %v334
    %496 = vmatpush1.bf16.msra.mxu0 %v333
    %497 = vmatprep.subr.bf16.mxu0 %v338
    %498 = vmatpush1.bf16.msra.mxu0 %v337
    %499 = vmatprep.subr.bf16.mxu0 %v342
    %500 = vmatpush1.bf16.msra.mxu0 %v341
    %501 = vmatprep.subr.bf16.mxu0 %v346
    %502 = vmatpush1.bf16.msra.mxu0 %v345
    %503 = vmatprep.subr.bf16.mxu0 %v350
    %504 = vmatpush1.bf16.msra.mxu0 %v349
    %505 = vmatprep.subr.bf16.mxu0 %v354
    %506 = vmatpush1.bf16.msra.mxu0 %v353
    %507 = vmatprep.mubr.bf16.mxu0 %v289
    %508 = vmatmul.mubr.bf16.gmra.mrb[0].mxu0 %v288
    %v509 = vpop.f32.mrb[0].mxu0
    %v510 = vadd.f32 %v458, %v509
    %v511 = vpop.f32.mrb[0].mxu0
    %v512 = vadd.f32 %v462, %v511
    %v513 = vpop.f32.mrb[0].mxu0
    %v514 = vpop.f32.mrb[0].mxu0
    %515 = vdwg.mxu0
    %516 = vmatprep.subr.bf16.mxu0 %v358
    %517 = vmatpush1.bf16.msra.mxu0 %v357
    %518 = vmatprep.subr.bf16.mxu0 %v362
    %519 = vmatpush1.bf16.msra.mxu0 %v361
    %520 = vmatprep.subr.bf16.mxu0 %v366
    %521 = vmatpush1.bf16.msra.mxu0 %v365
    %522 = vmatprep.subr.bf16.mxu0 %v370
    %523 = vmatpush1.bf16.msra.mxu0 %v369
    %524 = vmatprep.subr.bf16.mxu0 %v374
    %525 = vmatpush1.bf16.msra.mxu0 %v373
    %526 = vmatprep.subr.bf16.mxu0 %v378
    %527 = vmatpush1.bf16.msra.mxu0 %v377
    %528 = vmatprep.subr.bf16.mxu0 %v382
    %529 = vmatpush1.bf16.msra.mxu0 %v381
    %530 = vmatprep.subr.bf16.mxu0 %v386
    %531 = vmatpush1.bf16.msra.mxu0 %v385
    %532 = vmatprep.subr.bf16.mxu0 %v390
    %533 = vmatpush1.bf16.msra.mxu0 %v389
    %534 = vmatprep.subr.bf16.mxu0 %v394
    %535 = vmatpush1.bf16.msra.mxu0 %v393
    %536 = vmatprep.subr.bf16.mxu0 %v398
    %537 = vmatpush1.bf16.msra.mxu0 %v397
    %538 = vmatprep.subr.bf16.mxu0 %v402
    %539 = vmatpush1.bf16.msra.mxu0 %v401
    %540 = vmatprep.subr.bf16.mxu0 %v406
    %541 = vmatpush1.bf16.msra.mxu0 %v405
    %542 = vmatprep.subr.bf16.mxu0 %v410
    %543 = vmatpush1.bf16.msra.mxu0 %v409
    %544 = vmatprep.subr.bf16.mxu0 %v414
    %545 = vmatpush1.bf16.msra.mxu0 %v413
    %546 = vmatprep.subr.bf16.mxu0 %v418
    %547 = vmatpush1.bf16.msra.mxu0 %v417
    %548 = vmatprep.mubr.bf16.mxu0 %v291
    %549 = vmatmul.mubr.bf16.gmra.mrb[0].mxu0 %v290
    %v550 = vpop.f32.mrb[0].mxu0
    %v551 = vadd.f32 %v510, %v550
    %v552 = vpop.f32.mrb[0].mxu0
    %v553 = vadd.f32 %v512, %v552
    %v554 = vpop.f32.mrb[0].mxu0
    %v555 = vpop.f32.mrb[0].mxu0
    %556 = vdwg.mxu0
    %557 = vmatprep.subr.bf16.mxu0 %v422
    %558 = vmatpush1.bf16.msra.mxu0 %v421
    %559 = vmatprep.subr.bf16.mxu0 %v426
    %560 = vmatpush1.bf16.msra.mxu0 %v425
    %561 = vmatprep.subr.bf16.mxu0 %v430
    %562 = vmatpush1.bf16.msra.mxu0 %v429
    %563 = vmatprep.subr.bf16.mxu0 %v434
    %564 = vmatpush1.bf16.msra.mxu0 %v433
    %565 = vmatprep.subr.bf16.mxu0 %v438
    %566 = vmatpush1.bf16.msra.mxu0 %v437
    %567 = vmatprep.subr.bf16.mxu0 %v442
    %568 = vmatpush1.bf16.msra.mxu0 %v441
    %569 = vmatprep.subr.bf16.mxu0 %v446
    %570 = vmatpush1.bf16.msra.mxu0 %v445
    %571 = vmatprep.subr.bf16.mxu0 %v450
    %572 = vmatpush1.bf16.msra.mxu0 %v449
    %573 = vmatprep.subr.bf16.mxu0 0
    %574 = vmatpush1.bf16.msra.mxu0 0
    %575 = vmatprep.subr.bf16.mxu0 0
    %576 = vmatpush1.bf16.msra.mxu0 0
    %577 = vmatprep.subr.bf16.mxu0 0
    %578 = vmatpush1.bf16.msra.mxu0 0
    %579 = vmatprep.subr.bf16.mxu0 0
    %580 = vmatpush1.bf16.msra.mxu0 0
    %581 = vmatprep.subr.bf16.mxu0 0
    %582 = vmatpush1.bf16.msra.mxu0 0
    %583 = vmatprep.subr.bf16.mxu0 0
    %584 = vmatpush1.bf16.msra.mxu0 0
    %585 = vmatprep.subr.bf16.mxu0 0
    %586 = vmatpush1.bf16.msra.mxu0 0
    %587 = vmatprep.subr.bf16.mxu0 0
    %588 = vmatpush1.bf16.msra.mxu0 0
    %589 = vmatprep.mubr.bf16.mxu0 0
    %590 = vmatmul.mubr.bf16.gmra.mrb[0].mxu0 %v292
    %v591 = vpop.f32.mrb[0].mxu0
    %v592 = vadd.f32 %v551, %v591
    %v593 = vpop.f32.mrb[0].mxu0
    %v594 = vadd.f32 %v553, %v593
    %v595 = vpop.f32.mrb[0].mxu0
    %v596 = vpop.f32.mrb[0].mxu0
    %597 = vdwg.mxu0
    %598 = vmatprep.subr.bf16.mxu0 %v296
    %599 = vmatpush1.bf16.msra.mxu0 %v295
    %600 = vmatprep.subr.bf16.mxu0 %v300
    %601 = vmatpush1.bf16.msra.mxu0 %v299
    %602 = vmatprep.subr.bf16.mxu0 %v304
    %603 = vmatpush1.bf16.msra.mxu0 %v303
    %604 = vmatprep.subr.bf16.mxu0 %v308
    %605 = vmatpush1.bf16.msra.mxu0 %v307
    %606 = vmatprep.subr.bf16.mxu0 %v312
    %607 = vmatpush1.bf16.msra.mxu0 %v311
    %608 = vmatprep.subr.bf16.mxu0 %v316
    %609 = vmatpush1.bf16.msra.mxu0 %v315
    %610 = vmatprep.subr.bf16.mxu0 %v320
    %611 = vmatpush1.bf16.msra.mxu0 %v319
    %612 = vmatprep.subr.bf16.mxu0 %v324
    %613 = vmatpush1.bf16.msra.mxu0 %v323
    %614 = vmatprep.subr.bf16.mxu0 %v328
    %615 = vmatpush1.bf16.msra.mxu0 %v327
    %616 = vmatprep.subr.bf16.mxu0 %v332
    %617 = vmatpush1.bf16.msra.mxu0 %v331
    %618 = vmatprep.subr.bf16.mxu0 %v336
    %619 = vmatpush1.bf16.msra.mxu0 %v335
    %620 = vmatprep.subr.bf16.mxu0 %v340
    %621 = vmatpush1.bf16.msra.mxu0 %v339
    %622 = vmatprep.subr.bf16.mxu0 %v344
    %623 = vmatpush1.bf16.msra.mxu0 %v343
    %624 = vmatprep.subr.bf16.mxu0 %v348
    %625 = vmatpush1.bf16.msra.mxu0 %v347
    %626 = vmatprep.subr.bf16.mxu0 %v352
    %627 = vmatpush1.bf16.msra.mxu0 %v351
    %628 = vmatprep.subr.bf16.mxu0 %v356
    %629 = vmatpush1.bf16.msra.mxu0 %v355
    %630 = vmatprep.mubr.bf16.mxu0 %v289
    %631 = vmatmul.mubr.bf16.gmra.mrb[0].mxu0 %v288
    %v632 = vpop.f32.mrb[0].mxu0
    %v633 = vadd.f32 %v466, %v632
    %v634 = vpop.f32.mrb[0].mxu0
    %v635 = vadd.f32 %v470, %v634
    %v636 = vpop.f32.mrb[0].mxu0
    %v637 = vpop.f32.mrb[0].mxu0
    %638 = vdwg.mxu0
    %639 = vmatprep.subr.bf16.mxu0 %v360
    %640 = vmatpush1.bf16.msra.mxu0 %v359
    %641 = vmatprep.subr.bf16.mxu0 %v364
    %642 = vmatpush1.bf16.msra.mxu0 %v363
    %643 = vmatprep.subr.bf16.mxu0 %v368
    %644 = vmatpush1.bf16.msra.mxu0 %v367
    %645 = vmatprep.subr.bf16.mxu0 %v372
    %646 = vmatpush1.bf16.msra.mxu0 %v371
    %647 = vmatprep.subr.bf16.mxu0 %v376
    %648 = vmatpush1.bf16.msra.mxu0 %v375
    %649 = vmatprep.subr.bf16.mxu0 %v380
    %650 = vmatpush1.bf16.msra.mxu0 %v379
    %651 = vmatprep.subr.bf16.mxu0 %v384
    %652 = vmatpush1.bf16.msra.mxu0 %v383
    %653 = vmatprep.subr.bf16.mxu0 %v388
    %654 = vmatpush1.bf16.msra.mxu0 %v387
    %655 = vmatprep.subr.bf16.mxu0 %v392
    %656 = vmatpush1.bf16.msra.mxu0 %v391
    %657 = vmatprep.subr.bf16.mxu0 %v396
    %658 = vmatpush1.bf16.msra.mxu0 %v395
    %659 = vmatprep.subr.bf16.mxu0 %v400
    %660 = vmatpush1.bf16.msra.mxu0 %v399
    %661 = vmatprep.subr.bf16.mxu0 %v404
    %662 = vmatpush1.bf16.msra.mxu0 %v403
    %663 = vmatprep.subr.bf16.mxu0 %v408
    %664 = vmatpush1.bf16.msra.mxu0 %v407
    %665 = vmatprep.subr.bf16.mxu0 %v412
    %666 = vmatpush1.bf16.msra.mxu0 %v411
    %667 = vmatprep.subr.bf16.mxu0 %v416
    %668 = vmatpush1.bf16.msra.mxu0 %v415
    %669 = vmatprep.subr.bf16.mxu0 %v420
    %670 = vmatpush1.bf16.msra.mxu0 %v419
    %671 = vmatprep.mubr.bf16.mxu0 %v291
    %672 = vmatmul.mubr.bf16.gmra.mrb[0].mxu0 %v290
    %v673 = vpop.f32.mrb[0].mxu0
    %v674 = vadd.f32 %v633, %v673
    %v675 = vpop.f32.mrb[0].mxu0
    %v676 = vadd.f32 %v635, %v675
    %v677 = vpop.f32.mrb[0].mxu0
    %v678 = vpop.f32.mrb[0].mxu0
    %679 = vdwg.mxu0
    %680 = vmatprep.subr.bf16.mxu0 %v424
    %681 = vmatpush1.bf16.msra.mxu0 %v423
    %682 = vmatprep.subr.bf16.mxu0 %v428
    %683 = vmatpush1.bf16.msra.mxu0 %v427
    %684 = vmatprep.subr.bf16.mxu0 %v432
    %685 = vmatpush1.bf16.msra.mxu0 %v431
    %686 = vmatprep.subr.bf16.mxu0 %v436
    %687 = vmatpush1.bf16.msra.mxu0 %v435
    %688 = vmatprep.subr.bf16.mxu0 %v440
    %689 = vmatpush1.bf16.msra.mxu0 %v439
    %690 = vmatprep.subr.bf16.mxu0 %v444
    %691 = vmatpush1.bf16.msra.mxu0 %v443
    %692 = vmatprep.subr.bf16.mxu0 %v448
    %693 = vmatpush1.bf16.msra.mxu0 %v447
    %694 = vmatprep.subr.bf16.mxu0 %v452
    %695 = vmatpush1.bf16.msra.mxu0 %v451
    %696 = vmatprep.subr.bf16.mxu0 0
    %697 = vmatpush1.bf16.msra.mxu0 0
    %698 = vmatprep.subr.bf16.mxu0 0
    %699 = vmatpush1.bf16.msra.mxu0 0
    %700 = vmatprep.subr.bf16.mxu0 0
    %701 = vmatpush1.bf16.msra.mxu0 0
    %702 = vmatprep.subr.bf16.mxu0 0
    %703 = vmatpush1.bf16.msra.mxu0 0
    %704 = vmatprep.subr.bf16.mxu0 0
    %705 = vmatpush1.bf16.msra.mxu0 0
    %706 = vmatprep.subr.bf16.mxu0 0
    %707 = vmatpush1.bf16.msra.mxu0 0
    %708 = vmatprep.subr.bf16.mxu0 0
    %709 = vmatpush1.bf16.msra.mxu0 0
    %710 = vmatprep.subr.bf16.mxu0 0
    %711 = vmatpush1.bf16.msra.mxu0 0
    %712 = vmatprep.mubr.bf16.mxu0 0
    %713 = vmatmul.mubr.bf16.gmra.mrb[0].mxu0 %v292
    %v714 = vpop.f32.mrb[0].mxu0
    %v715 = vadd.f32 %v674, %v714
    %v716 = vpop.f32.mrb[0].mxu0
    %v717 = vadd.f32 %v676, %v716
    %v718 = vpop.f32.mrb[0].mxu0
    %v719 = vpop.f32.mrb[0].mxu0
    %720 = vdwg.mxu0
    %v721 = vmax.f32 %v592, 0.0
    %v722 = vmax.f32 %v594, 0.0
    %v723 = vmax.f32 %v715, 0.0
    %v724 = vmax.f32 %v717, 0.0
    %v725 = vpack.c.bf16 %v721, %v721
    %v726 = vpack.c.bf16 %v722, %v722
    %v727 = vpack.c.bf16 %v723, %v723
    %v728 = vpack.c.bf16 %v724, %v724
    %v729 = vld [vmem:[%s5] sm:$0xf]
    %v730 = vld [vmem:[%s5 + $0x4] sm:$0xf]
    %v731 = vld [vmem:[%s5 + $0x8] sm:$0xf]
    %v732 = vld [vmem:[%s5 + $0xc] sm:$0xf]
    %v733 = vld [vmem:[%s5 + $0x10] sm:$0xf]
    %v734 = vld [vmem:[%s5 + $0x14] sm:$0xf]
    %v735 = vld [vmem:[%s5 + $0x18] sm:$0xf]
    %v736 = vld [vmem:[%s5 + $0x1c] sm:$0xf]
    %v737 = vld [vmem:[%s5 + $0x20] sm:$0xf]
    %v738 = vld [vmem:[%s5 + $0x24] sm:$0xf]
    %v739 = vld [vmem:[%s5 + $0x28] sm:$0xf]
    %v740 = vld [vmem:[%s5 + $0x2c] sm:$0xf]
    %v741 = vld [vmem:[%s5 + $0x30] sm:$0xf]
    %v742 = vld [vmem:[%s5 + $0x34] sm:$0xf]
    %v743 = vld [vmem:[%s5 + $0x38] sm:$0xf]
    %v744 = vld [vmem:[%s5 + $0x3c] sm:$0xf]
    %v745 = vld [vmem:[%s5 + $0x40] sm:$0xf]
    %v746 = vld [vmem:[%s5 + $0x44] sm:$0xf]
    %v747 = vld [vmem:[%s5 + $0x48] sm:$0xf]
    %v748 = vld [vmem:[%s5 + $0x4c] sm:$0xf]
    %v749 = vld [vmem:[%s5 + $0x50] sm:$0xf]
    %v750 = vld [vmem:[%s5 + $0x54] sm:$0xf]
    %v751 = vld [vmem:[%s5 + $0x58] sm:$0xf]
    %v752 = vld [vmem:[%s5 + $0x5c] sm:$0xf]
    %v753 = vld [vmem:[%s5 + $0x60] sm:$0xf]
    %v754 = vld [vmem:[%s5 + $0x64] sm:$0xf]
    %v755 = vld [vmem:[%s5 + $0x68] sm:$0xf]
    %v756 = vld [vmem:[%s5 + $0x6c] sm:$0xf]
    %v757 = vld [vmem:[%s5 + $0x70] sm:$0xf]
    %v758 = vld [vmem:[%s5 + $0x74] sm:$0xf]
    %v759 = vld [vmem:[%s5 + $0x78] sm:$0xf]
    %v760 = vld [vmem:[%s5 + $0x7c] sm:$0xf]
    %v761 = vld [vmem:[%s5 + $0x80] sm:$0xf]
    %v762 = vld [vmem:[%s5 + $0x84] sm:$0xf]
    %v763 = vld [vmem:[%s5 + $0x88] sm:$0xf]
    %v764 = vld [vmem:[%s5 + $0x8c] sm:$0xf]
    %v765 = vld [vmem:[%s5 + $0x90] sm:$0xf]
    %v766 = vld [vmem:[%s5 + $0x94] sm:$0xf]
    %v767 = vld [vmem:[%s5 + $0x98] sm:$0xf]
    %v768 = vld [vmem:[%s5 + $0x9c] sm:$0xf]
    %v769 = vld [vmem:[%s5 + $0xa0] sm:$0xf]
    %v770 = vld [vmem:[%s5 + $0xa4] sm:$0xf]
    %v771 = vld [vmem:[%s5 + $0xa8] sm:$0xf]
    %v772 = vld [vmem:[%s5 + $0xac] sm:$0xf]
    %v773 = vld [vmem:[%s5 + $0xb0] sm:$0xf]
    %v774 = vld [vmem:[%s5 + $0xb4] sm:$0xf]
    %v775 = vld [vmem:[%s5 + $0xb8] sm:$0xf]
    %v776 = vld [vmem:[%s5 + $0xbc] sm:$0xf]
    %v777 = vld [vmem:[%s5 + $0xc0] sm:$0xf]
    %v778 = vld [vmem:[%s5 + $0xc4] sm:$0xf]
    %v779 = vld [vmem:[%s5 + $0xc8] sm:$0xf]
    %v780 = vld [vmem:[%s5 + $0xcc] sm:$0xf]
    %v781 = vld [vmem:[%s5 + $0xd0] sm:$0xf]
    %v782 = vld [vmem:[%s5 + $0xd4] sm:$0xf]
    %v783 = vld [vmem:[%s5 + $0xd8] sm:$0xf]
    %v784 = vld [vmem:[%s5 + $0xdc] sm:$0xf]
    %v785 = vld [vmem:[%s5 + $0xe0] sm:$0xf]
    %v786 = vld [vmem:[%s5 + $0xe4] sm:$0xf]
    %v787 = vld [vmem:[%s5 + $0xe8] sm:$0xf]
    %v788 = vld [vmem:[%s5 + $0xec] sm:$0xf]
    %v789 = vld [vmem:[%s5 + $0xf0] sm:$0xf]
    %v790 = vld [vmem:[%s5 + $0xf4] sm:$0xf]
    %v791 = vld [vmem:[%s5 + $0xf8] sm:$0xf]
    %v792 = vld [vmem:[%s5 + $0xfc] sm:$0xf]
    %v793 = vld [vmem:[%s6] sm:$0x1]
    %v795 = vlaneseq
    %v796 = vshrl.u32 %v795, 7
    %v797 = vsub.s32 0, %v796
    %v798 = vrot.slane %v793, %v797
    %v864 = vunpack.c.l.b16 %v729
    %v865 = vunpack.c.l.b16 %v730
    %v866 = vunpack.c.l.b16 %v731
    %v867 = vunpack.c.l.b16 %v732
    %v868 = vunpack.c.l.b16 %v733
    %v869 = vunpack.c.l.b16 %v734
    %v870 = vunpack.c.l.b16 %v735
    %v871 = vunpack.c.l.b16 %v736
    %v872 = vunpack.c.l.b16 %v737
    %v873 = vunpack.c.l.b16 %v738
    %v874 = vunpack.c.l.b16 %v739
    %v875 = vunpack.c.l.b16 %v740
    %v876 = vunpack.c.l.b16 %v741
    %v877 = vunpack.c.l.b16 %v742
    %v878 = vunpack.c.l.b16 %v743
    %v879 = vunpack.c.l.b16 %v744
    %v880 = vunpack.c.l.b16 %v745
    %v881 = vunpack.c.l.b16 %v746
    %v882 = vunpack.c.l.b16 %v747
    %v883 = vunpack.c.l.b16 %v748
    %v884 = vunpack.c.l.b16 %v749
    %v885 = vunpack.c.l.b16 %v750
    %v886 = vunpack.c.l.b16 %v751
    %v887 = vunpack.c.l.b16 %v752
    %v888 = vunpack.c.l.b16 %v753
    %v889 = vunpack.c.l.b16 %v754
    %v890 = vunpack.c.l.b16 %v755
    %v891 = vunpack.c.l.b16 %v756
    %v892 = vunpack.c.l.b16 %v757
    %v893 = vunpack.c.l.b16 %v758
    %v894 = vunpack.c.l.b16 %v759
    %v895 = vunpack.c.l.b16 %v760
    %v896 = vunpack.c.l.b16 %v761
    %v897 = vunpack.c.l.b16 %v762
    %v898 = vunpack.c.l.b16 %v763
    %v899 = vunpack.c.l.b16 %v764
    %v900 = vunpack.c.l.b16 %v765
    %v901 = vunpack.c.l.b16 %v766
    %v902 = vunpack.c.l.b16 %v767
    %v903 = vunpack.c.l.b16 %v768
    %v904 = vunpack.c.l.b16 %v769
    %v905 = vunpack.c.l.b16 %v770
    %v906 = vunpack.c.l.b16 %v771
    %v907 = vunpack.c.l.b16 %v772
    %v908 = vunpack.c.l.b16 %v773
    %v909 = vunpack.c.l.b16 %v774
    %v910 = vunpack.c.l.b16 %v775
    %v911 = vunpack.c.l.b16 %v776
    %v912 = vunpack.c.l.b16 %v777
    %v913 = vunpack.c.l.b16 %v778
    %v914 = vunpack.c.l.b16 %v779
    %v915 = vunpack.c.l.b16 %v780
    %v916 = vunpack.c.l.b16 %v781
    %v917 = vunpack.c.l.b16 %v782
    %v918 = vunpack.c.l.b16 %v783
    %v919 = vunpack.c.l.b16 %v784
    %v920 = vunpack.c.l.b16 %v785
    %v921 = vunpack.c.l.b16 %v786
    %v922 = vunpack.c.l.b16 %v787
    %v923 = vunpack.c.l.b16 %v788
    %v924 = vunpack.c.l.b16 %v789
    %v925 = vunpack.c.l.b16 %v790
    %v926 = vunpack.c.l.b16 %v791
    %v927 = vunpack.c.l.b16 %v792
    %v928 = vpack.c.b16 %v865, %v864
    %v929 = vpack.c.b16 %v867, %v866
    %v930 = vpack.c.b16 %v869, %v868
    %v931 = vpack.c.b16 %v871, %v870
    %v932 = vpack.c.b16 %v873, %v872
    %v933 = vpack.c.b16 %v875, %v874
    %v934 = vpack.c.b16 %v877, %v876
    %v935 = vpack.c.b16 %v879, %v878
    %v936 = vpack.c.b16 %v881, %v880
    %v937 = vpack.c.b16 %v883, %v882
    %v938 = vpack.c.b16 %v885, %v884
    %v939 = vpack.c.b16 %v887, %v886
    %v940 = vpack.c.b16 %v889, %v888
    %v941 = vpack.c.b16 %v891, %v890
    %v942 = vpack.c.b16 %v893, %v892
    %v943 = vpack.c.b16 %v895, %v894
    %v944 = vpack.c.b16 %v897, %v896
    %v945 = vpack.c.b16 %v899, %v898
    %v946 = vpack.c.b16 %v901, %v900
    %v947 = vpack.c.b16 %v903, %v902
    %v948 = vpack.c.b16 %v905, %v904
    %v949 = vpack.c.b16 %v907, %v906
    %v950 = vpack.c.b16 %v909, %v908
    %v951 = vpack.c.b16 %v911, %v910
    %v952 = vpack.c.b16 %v913, %v912
    %v953 = vpack.c.b16 %v915, %v914
    %v954 = vpack.c.b16 %v917, %v916
    %v955 = vpack.c.b16 %v919, %v918
    %v956 = vpack.c.b16 %v921, %v920
    %v957 = vpack.c.b16 %v923, %v922
    %v958 = vpack.c.b16 %v925, %v924
    %v959 = vpack.c.b16 %v927, %v926
    %992 = vmatprep.subr.bf16.mxu0 0
    %993 = vmatpush1.bf16.msra.mxu0 %v928
    %994 = vmatprep.subr.bf16.mxu0 0
    %995 = vmatpush1.bf16.msra.mxu0 %v929
    %996 = vmatprep.subr.bf16.mxu0 0
    %997 = vmatpush1.bf16.msra.mxu0 %v930
    %998 = vmatprep.subr.bf16.mxu0 0
    %999 = vmatpush1.bf16.msra.mxu0 %v931
    %1000 = vmatprep.subr.bf16.mxu0 0
    %1001 = vmatpush1.bf16.msra.mxu0 %v932
    %1002 = vmatprep.subr.bf16.mxu0 0
    %1003 = vmatpush1.bf16.msra.mxu0 %v933
    %1004 = vmatprep.subr.bf16.mxu0 0
    %1005 = vmatpush1.bf16.msra.mxu0 %v934
    %1006 = vmatprep.subr.bf16.mxu0 0
    %1007 = vmatpush1.bf16.msra.mxu0 %v935
    %1008 = vmatprep.subr.bf16.mxu0 0
    %1009 = vmatpush1.bf16.msra.mxu0 %v936
    %1010 = vmatprep.subr.bf16.mxu0 0
    %1011 = vmatpush1.bf16.msra.mxu0 %v937
    %1012 = vmatprep.subr.bf16.mxu0 0
    %1013 = vmatpush1.bf16.msra.mxu0 %v938
    %1014 = vmatprep.subr.bf16.mxu0 0
    %1015 = vmatpush1.bf16.msra.mxu0 %v939
    %1016 = vmatprep.subr.bf16.mxu0 0
    %1017 = vmatpush1.bf16.msra.mxu0 %v940
    %1018 = vmatprep.subr.bf16.mxu0 0
    %1019 = vmatpush1.bf16.msra.mxu0 %v941
    %1020 = vmatprep.subr.bf16.mxu0 0
    %1021 = vmatpush1.bf16.msra.mxu0 %v942
    %1022 = vmatprep.subr.bf16.mxu0 0
    %1023 = vmatpush1.bf16.msra.mxu0 %v943
    %1024 = vmatprep.mubr.bf16.mxu0 %v726
    %1025 = vmatmul.mubr.bf16.gmra.mrb[0].mxu0 %v725
    %v1026 = vpop.f32.mrb[0].mxu0
    %v1027 = vadd.f32 %v798, %v1026
    %v1028 = vpop.f32.mrb[0].mxu0
    %v1029 = vpop.f32.mrb[0].mxu0
    %v1030 = vpop.f32.mrb[0].mxu0
    %1031 = vdwg.mxu0
    %1032 = vmatprep.subr.bf16.mxu0 0
    %1033 = vmatpush1.bf16.msra.mxu0 %v944
    %1034 = vmatprep.subr.bf16.mxu0 0
    %1035 = vmatpush1.bf16.msra.mxu0 %v945
    %1036 = vmatprep.subr.bf16.mxu0 0
    %1037 = vmatpush1.bf16.msra.mxu0 %v946
    %1038 = vmatprep.subr.bf16.mxu0 0
    %1039 = vmatpush1.bf16.msra.mxu0 %v947
    %1040 = vmatprep.subr.bf16.mxu0 0
    %1041 = vmatpush1.bf16.msra.mxu0 %v948
    %1042 = vmatprep.subr.bf16.mxu0 0
    %1043 = vmatpush1.bf16.msra.mxu0 %v949
    %1044 = vmatprep.subr.bf16.mxu0 0
    %1045 = vmatpush1.bf16.msra.mxu0 %v950
    %1046 = vmatprep.subr.bf16.mxu0 0
    %1047 = vmatpush1.bf16.msra.mxu0 %v951
    %1048 = vmatprep.subr.bf16.mxu0 0
    %1049 = vmatpush1.bf16.msra.mxu0 %v952
    %1050 = vmatprep.subr.bf16.mxu0 0
    %1051 = vmatpush1.bf16.msra.mxu0 %v953
    %1052 = vmatprep.subr.bf16.mxu0 0
    %1053 = vmatpush1.bf16.msra.mxu0 %v954
    %1054 = vmatprep.subr.bf16.mxu0 0
    %1055 = vmatpush1.bf16.msra.mxu0 %v955
    %1056 = vmatprep.subr.bf16.mxu0 0
    %1057 = vmatpush1.bf16.msra.mxu0 %v956
    %1058 = vmatprep.subr.bf16.mxu0 0
    %1059 = vmatpush1.bf16.msra.mxu0 %v957
    %1060 = vmatprep.subr.bf16.mxu0 0
    %1061 = vmatpush1.bf16.msra.mxu0 %v958
    %1062 = vmatprep.subr.bf16.mxu0 0
    %1063 = vmatpush1.bf16.msra.mxu0 %v959
    %1064 = vmatprep.mubr.bf16.mxu0 %v728
    %1065 = vmatmul.mubr.bf16.gmra.mrb[0].mxu0 %v727
    %v1066 = vpop.f32.mrb[0].mxu0
    %v1067 = vadd.f32 %v1027, %v1066
    %v1068 = vpop.f32.mrb[0].mxu0
    %v1069 = vpop.f32.mrb[0].mxu0
    %v1070 = vpop.f32.mrb[0].mxu0
    %1071 = vdwg.mxu0
    %v1072 = vtanh.pop %v1067
    %vm1073 = vcmask 31744
    %1074 = vst.msk [vmem:[%s7] sm:$0xff] %vm1073, %v1072
    // Predicated region
    $region26: #{actor_forward.1} parent=1 // pred_check
      _
    $region27: #{actor_forward.1} parent=1 // pred_check_branch
      %1076 = sbr.rel (0) target = $region29
    $region28: #{actor_forward.1} parent=1 // pred_region
      _
    $region29: #{actor_forward.1} parent=1 // pred_fallthru
      _
    // Predicated region
    $region30: #{actor_forward.1} parent=1 // pred_check
      _
    $region31: #{actor_forward.1} parent=1 // pred_check_branch
      %1078 = sbr.rel (0) target = $region33
    $region32: #{actor_forward.1} parent=1 // pred_region
      _
    $region33: #{actor_forward.1} parent=1 // pred_fallthru
      _
  %1079 = vsyncmov [#allocation3]
  %s1080 = vpop.sfrf %1079
  %p1081 = scmp.eq.s32.totalorder %s1080, 0
  %p1082 = pneg %p1081
  %1084 = shalt.err (%p1082)

</llo_original>
